<compile_context>
chip_gen: v7x
topology: tpu7x:2x2x1
jax: 0.10.0
libtpu: 0.0.40
codegen_flags: <defaults>
</compile_context>

<pallas_src>
import jax
import jax.numpy as jnp
from jax import lax
from jax.experimental import pallas as pl
from jax.experimental.pallas import tpu as pltpu


def _round_up(x, m):
    return ((x + m - 1) // m) * m


def _decoder_kernel(x_ref,
                    w1_ref, b1_ref,
                    w2_ref, b2_ref,
                    w3_ref, b3_ref,
                    w4_ref, b4_ref,
                    out_ref):
    """Fused feature-major MLP decoder for one [TILE_M, D] row tile.

    out_ref is [2, TILE_M]: row 0 = mu, row 1 = sigma = 0.1 + 0.9*softplus(.).
    """
    mm_dtype = w1_ref.dtype

    # First layer contracts on x's last (feature) dim directly -> [H1, TILE_M];
    # no standalone transpose pass, M stays in the lane dimension throughout.
    h = lax.dot_general(w1_ref[...], x_ref[...],
                        dimension_numbers=(((1,), (1,)), ((), ())),
                        preferred_element_type=jnp.float32) + b1_ref[...]
    h = jnp.maximum(h, 0.0)

    h = jnp.dot(w2_ref[...], h.astype(mm_dtype),
                preferred_element_type=jnp.float32) + b2_ref[...]
    h = jnp.maximum(h, 0.0)

    h = jnp.dot(w3_ref[...], h.astype(mm_dtype),
                preferred_element_type=jnp.float32) + b3_ref[...]
    h = jnp.maximum(h, 0.0)

    out = jnp.dot(w4_ref[...], h.astype(mm_dtype),
                  preferred_element_type=jnp.float32) + b4_ref[...]    # [2, TILE_M]

    mu = out[0:1, :]
    log_sigma = out[1:2, :]
    # Numerically-stable softplus, only on the sigma row (single EUP unit).
    sp = jnp.maximum(log_sigma, 0.0) + jnp.log1p(jnp.exp(-jnp.abs(log_sigma)))
    out_ref[...] = jnp.concatenate([mu, 0.1 + 0.9 * sp], axis=0)


def cnp_decoder_forward(latent_target, params, *, tile_m=8192,
                        matmul_dtype=jnp.float32):
    """latent_target: [B, N, layers[0] + input_dim] -> (mu [B,N], sigma [B,N])."""
    B, N, D = latent_target.shape
    M = B * N

    # Row tile: lane dim must be a multiple of 128.  Prefer at least 2 grid
    # steps (when M allows) so the "parallel" row axis can shard across both
    # v7x TensorCores.
    m_ceil = _round_up(M, 128)
    tile_m = min(_round_up(tile_m, 128), m_ceil)
    if tile_m >= m_ceil and m_ceil >= 256:
        tile_m = _round_up(pl.cdiv(m_ceil, 2), 128)
    grid = (pl.cdiv(M, tile_m),)

    x = latent_target.reshape(M, D)
    if x.dtype != matmul_dtype:
        # For best perf (v5e/v6e/v7x) provide latent_target already in
        # matmul_dtype (e.g. bf16) so this extra HBM conversion pass vanishes.
        x = x.astype(matmul_dtype)

    (w1, b1), (w2, b2), (w3, b3), (w4, b4) = params
    ws = [w.astype(matmul_dtype) for w in (w1, w2, w3, w4)]
    bs = [b.reshape(-1, 1).astype(jnp.float32) for b in (b1, b2, b3, b4)]

    operands = (x, ws[0], bs[0], ws[1], bs[1], ws[2], bs[2], ws[3], bs[3])

    # x is streamed per grid step; weights/biases use a constant index_map so
    # the same block stays resident in VMEM across all steps.
    x_spec = pl.BlockSpec((tile_m, D), lambda i: (i, 0))

    def resident(shape):
        return pl.BlockSpec(shape, lambda i: (0, 0))

    in_specs = [x_spec] + [resident(op.shape) for op in operands[1:]]
    out_spec = pl.BlockSpec((2, tile_m), lambda i: (0, i))

    h1, h2, h3 = w1.shape[0], w2.shape[0], w3.shape[0]
    hmax = max(h1, h2, h3, 2)
    itemsize = jnp.dtype(matmul_dtype).itemsize

    # Per-tile VMEM: x double-buffer + resident params (assume double-buffered)
    # + ~4 f32 [hmax, tile_m] activation temps + output double-buffer; 50%
    # headroom, clamped to [16 MiB, 32 MiB] (safe on v5e/v6e/v7x).
    param_bytes = sum(int(op.size) * op.dtype.itemsize for op in operands[1:])
    vmem_bytes = (2 * tile_m * D * itemsize
                  + 2 * param_bytes
                  + 4 * hmax * tile_m * 4
                  + 2 * 2 * tile_m * 4)
    vmem_limit = min(max(int(1.5 * vmem_bytes) + (2 << 20), 16 << 20), 32 << 20)

    flops = int(2 * M * (D * h1 + h1 * h2 + h2 * h3 + h3 * 2))
    bytes_accessed = int(x.size * x.dtype.itemsize + param_bytes + 2 * M * 4)

    out = pl.pallas_call(
        _decoder_kernel,
        out_shape=jax.ShapeDtypeStruct((2, M), jnp.float32),
        grid_spec=pltpu.PrefetchScalarGridSpec(
            num_scalar_prefetch=0,
            grid=grid,
            in_specs=in_specs,
            out_specs=out_spec,
        ),
        compiler_params=pltpu.CompilerParams(
            dimension_semantics=("parallel",),
            vmem_limit_bytes=vmem_limit,
        ),
        cost_estimate=pl.CostEstimate(
            flops=flops,
            transcendentals=int(2 * M),
            bytes_accessed=bytes_accessed,
        ),
    )(*operands)

    mu = out[0, :].reshape(B, N)
    sigma = out[1, :].reshape(B, N)
    return mu, sigma


def init_params(key, layers=(32, 32, 32, 32), input_dim=3):
    """Deterministic Linear params in PyTorch layout: W [out, in], b [out]."""
    dims_in = [layers[0] + input_dim, layers[1], layers[2], layers[-1]]
    dims_out = [layers[1], layers[2], layers[3], 2]
    params = []
    for fan_in, fan_out in zip(dims_in, dims_out):
        key, kw, kb = jax.random.split(key, 3)
        bound = 1.0 / jnp.sqrt(fan_in)  # PyTorch Linear default init range
        w = jax.random.uniform(kw, (fan_out, fan_in), jnp.float32, -bound, bound)
        b = jax.random.uniform(kb, (fan_out,), jnp.float32, -bound, bound)
        params.append((w, b))
    return params


def reference_forward(latent_target, params):
    """Pure-JAX reference mirroring the PyTorch module (dropout=None)."""
    h = latent_target
    for w, b in params[:-1]:
        h = jax.nn.relu(h @ w.T + b)
    w4, b4 = params[-1]
    h = h @ w4.T + b4
    mu = h[..., 0]
    sigma = 0.1 + 0.9 * jax.nn.softplus(h[..., 1])
    return mu, sigma


if __name__ == "__main__":
    # TODO(synk): dropout (train-mode only) is not implemented; forward here is
    # the inference path (dropout=None), matching the reference module default.
    layers = (32, 32, 32, 32)
    input_dim = 3
    D = layers[0] + input_dim

    key = jax.random.PRNGKey(0)
    params = init_params(key, layers=layers, input_dim=input_dim)

    # Case 1: tiny shape (single grid step, partial block).
    B, N = 2, 8
    key, kx = jax.random.split(key)
    latent_target = jax.random.normal(kx, (B, N, D), jnp.float32)

    mu, sigma = cnp_decoder_forward(latent_target, params)
    mu, sigma = jax.block_until_ready((mu, sigma))
    mu_ref, sigma_ref = reference_forward(latent_target, params)
    assert mu.shape == (B, N) and sigma.shape == (B, N)
    assert jnp.allclose(mu, mu_ref, atol=1e-5, rtol=1e-5)
    assert jnp.allclose(sigma, sigma_ref, atol=1e-5, rtol=1e-5)

    # Case 2: larger shape exercising multiple grid steps + a partial last
    # input block (M = 1200 -> tile_m = 640, grid = 2).
    B2, N2 = 3, 400
    key, kx2 = jax.random.split(key)
    latent_target2 = jax.random.normal(kx2, (B2, N2, D), jnp.float32)

    mu2, sigma2 = cnp_decoder_forward(latent_target2, params)
    mu2, sigma2 = jax.block_until_ready((mu2, sigma2))
    mu2_ref, sigma2_ref = reference_forward(latent_target2, params)
    assert jnp.allclose(mu2, mu2_ref, atol=1e-5, rtol=1e-5)
    assert jnp.allclose(sigma2, sigma2_ref, atol=1e-5, rtol=1e-5)

    # Case 3: bf16 streaming path (input cast upstream so the wrapper adds no
    # extra conversion pass); looser tolerances vs the f32 reference.
    mu3, sigma3 = cnp_decoder_forward(latent_target2.astype(jnp.bfloat16),
                                      params, matmul_dtype=jnp.bfloat16)
    mu3, sigma3 = jax.block_until_ready((mu3, sigma3))
    assert jnp.allclose(mu3, mu2_ref, atol=5e-2, rtol=5e-2)
    assert jnp.allclose(sigma3, sigma2_ref, atol=5e-2, rtol=5e-2)

    print("KERNEL_OK")
</pallas_src>

<mosaic_0001>
module attributes {stable_mosaic.version = 11 : i64} {
  func.func @_decoder_kernel(%arg0: i32, %arg1: memref<128x35xf32, #tpu.memory_space<vmem>>, %arg2: memref<32x35xf32, #tpu.memory_space<vmem>>, %arg3: memref<32x1xf32, #tpu.memory_space<vmem>>, %arg4: memref<32x32xf32, #tpu.memory_space<vmem>>, %arg5: memref<32x1xf32, #tpu.memory_space<vmem>>, %arg6: memref<32x32xf32, #tpu.memory_space<vmem>>, %arg7: memref<32x1xf32, #tpu.memory_space<vmem>>, %arg8: memref<2x32xf32, #tpu.memory_space<vmem>>, %arg9: memref<2x1xf32, #tpu.memory_space<vmem>>, %arg10: memref<2x128xf32, #tpu.memory_space<vmem>>) attributes {dimension_semantics = [#tpu.dimension_semantics<parallel>], iteration_bounds = array<i64: 1>, scalar_prefetch = 0 : i64, scratch_operands = 0 : i64, tpu.core_type = #tpu.core_type<tc>, window_params = [{transform_indices = @transform_0, window_bounds = array<i64: 128, 35>}, {pipeline_mode = #tpu.pipeline_mode<synchronous>, transform_indices = @transform_1, window_bounds = array<i64: 32, 35>}, {pipeline_mode = #tpu.pipeline_mode<synchronous>, transform_indices = @transform_2, window_bounds = array<i64: 32, 1>}, {pipeline_mode = #tpu.pipeline_mode<synchronous>, transform_indices = @transform_3, window_bounds = array<i64: 32, 32>}, {pipeline_mode = #tpu.pipeline_mode<synchronous>, transform_indices = @transform_4, window_bounds = array<i64: 32, 1>}, {pipeline_mode = #tpu.pipeline_mode<synchronous>, transform_indices = @transform_5, window_bounds = array<i64: 32, 32>}, {pipeline_mode = #tpu.pipeline_mode<synchronous>, transform_indices = @transform_6, window_bounds = array<i64: 32, 1>}, {pipeline_mode = #tpu.pipeline_mode<synchronous>, transform_indices = @transform_7, window_bounds = array<i64: 2, 32>}, {pipeline_mode = #tpu.pipeline_mode<synchronous>, transform_indices = @transform_8, window_bounds = array<i64: 2, 1>}, {transform_indices = @transform_9, window_bounds = array<i64: 2, 128>}]} {
    %c0 = arith.constant 0 : index
    %c0_0 = arith.constant 0 : index
    %0 = vector.load %arg2[%c0, %c0_0] : memref<32x35xf32, #tpu.memory_space<vmem>>, vector<32x35xf32>
    %c0_1 = arith.constant 0 : index
    %c0_2 = arith.constant 0 : index
    %1 = vector.load %arg1[%c0_1, %c0_2] : memref<128x35xf32, #tpu.memory_space<vmem>>, vector<128x35xf32>
    %cst = arith.constant dense<0.000000e+00> : vector<32x128xf32>
    %2 = tpu.matmul %0, %1, %cst {dimension_numbers = #tpu.dot_dimension_numbers<[1], [1], [0], [0], [0, 0, 1, 0], [], []>} : vector<32x35xf32>, vector<128x35xf32>, vector<32x128xf32> -> vector<32x128xf32>
    %c0_3 = arith.constant 0 : index
    %c0_4 = arith.constant 0 : index
    %3 = vector.load %arg3[%c0_3, %c0_4] : memref<32x1xf32, #tpu.memory_space<vmem>>, vector<32x1xf32>
    %4 = vector.broadcast %3 : vector<32x1xf32> to vector<32x128xf32>
    %5 = arith.addf %2, %4 : vector<32x128xf32>
    %cst_5 = arith.constant 0.000000e+00 : f32
    %6 = vector.broadcast %cst_5 : f32 to vector<32x128xf32>
    %7 = arith.maximumf %5, %6 : vector<32x128xf32>
    %c0_6 = arith.constant 0 : index
    %c0_7 = arith.constant 0 : index
    %8 = vector.load %arg4[%c0_6, %c0_7] : memref<32x32xf32, #tpu.memory_space<vmem>>, vector<32x32xf32>
    %cst_8 = arith.constant dense<0.000000e+00> : vector<32x128xf32>
    %9 = tpu.matmul %8, %7, %cst_8 {dimension_numbers = #tpu.dot_dimension_numbers<[1], [0], [0], [1], [0, 0, 1, 1], [], []>} : vector<32x32xf32>, vector<32x128xf32>, vector<32x128xf32> -> vector<32x128xf32>
    %c0_9 = arith.constant 0 : index
    %c0_10 = arith.constant 0 : index
    %10 = vector.load %arg5[%c0_9, %c0_10] : memref<32x1xf32, #tpu.memory_space<vmem>>, vector<32x1xf32>
    %11 = vector.broadcast %10 : vector<32x1xf32> to vector<32x128xf32>
    %12 = arith.addf %9, %11 : vector<32x128xf32>
    %cst_11 = arith.constant 0.000000e+00 : f32
    %13 = vector.broadcast %cst_11 : f32 to vector<32x128xf32>
    %14 = arith.maximumf %12, %13 : vector<32x128xf32>
    %c0_12 = arith.constant 0 : index
    %c0_13 = arith.constant 0 : index
    %15 = vector.load %arg6[%c0_12, %c0_13] : memref<32x32xf32, #tpu.memory_space<vmem>>, vector<32x32xf32>
    %cst_14 = arith.constant dense<0.000000e+00> : vector<32x128xf32>
    %16 = tpu.matmul %15, %14, %cst_14 {dimension_numbers = #tpu.dot_dimension_numbers<[1], [0], [0], [1], [0, 0, 1, 1], [], []>} : vector<32x32xf32>, vector<32x128xf32>, vector<32x128xf32> -> vector<32x128xf32>
    %c0_15 = arith.constant 0 : index
    %c0_16 = arith.constant 0 : index
    %17 = vector.load %arg7[%c0_15, %c0_16] : memref<32x1xf32, #tpu.memory_space<vmem>>, vector<32x1xf32>
    %18 = vector.broadcast %17 : vector<32x1xf32> to vector<32x128xf32>
    %19 = arith.addf %16, %18 : vector<32x128xf32>
    %cst_17 = arith.constant 0.000000e+00 : f32
    %20 = vector.broadcast %cst_17 : f32 to vector<32x128xf32>
    %21 = arith.maximumf %19, %20 : vector<32x128xf32>
    %c0_18 = arith.constant 0 : index
    %c0_19 = arith.constant 0 : index
    %22 = vector.load %arg8[%c0_18, %c0_19] : memref<2x32xf32, #tpu.memory_space<vmem>>, vector<2x32xf32>
    %cst_20 = arith.constant dense<0.000000e+00> : vector<2x128xf32>
    %23 = tpu.matmul %22, %21, %cst_20 {dimension_numbers = #tpu.dot_dimension_numbers<[1], [0], [0], [1], [0, 0, 1, 1], [], []>} : vector<2x32xf32>, vector<32x128xf32>, vector<2x128xf32> -> vector<2x128xf32>
    %c0_21 = arith.constant 0 : index
    %c0_22 = arith.constant 0 : index
    %24 = vector.load %arg9[%c0_21, %c0_22] : memref<2x1xf32, #tpu.memory_space<vmem>>, vector<2x1xf32>
    %25 = vector.broadcast %24 : vector<2x1xf32> to vector<2x128xf32>
    %26 = arith.addf %23, %25 : vector<2x128xf32>
    %27 = vector.extract_strided_slice %26 {offsets = [0, 0], sizes = [1, 128], strides = [1, 1]} : vector<2x128xf32> to vector<1x128xf32>
    %28 = vector.extract_strided_slice %26 {offsets = [1, 0], sizes = [1, 128], strides = [1, 1]} : vector<2x128xf32> to vector<1x128xf32>
    %cst_23 = arith.constant 0.000000e+00 : f32
    %29 = vector.broadcast %cst_23 : f32 to vector<1x128xf32>
    %30 = arith.maximumf %28, %29 : vector<1x128xf32>
    %31 = math.absf %28 : vector<1x128xf32>
    %cst_24 = arith.constant 0.000000e+00 : f32
    %32 = vector.broadcast %cst_24 : f32 to vector<1x128xf32>
    %33 = arith.subf %32, %31 : vector<1x128xf32>
    %34 = math.exp %33 : vector<1x128xf32>
    %35 = math.log1p %34 : vector<1x128xf32>
    %36 = arith.addf %30, %35 : vector<1x128xf32>
    %cst_25 = arith.constant 0.899999976 : f32
    %37 = vector.broadcast %cst_25 : f32 to vector<1x128xf32>
    %38 = arith.mulf %37, %36 : vector<1x128xf32>
    %cst_26 = arith.constant 1.000000e-01 : f32
    %39 = vector.broadcast %cst_26 : f32 to vector<1x128xf32>
    %40 = arith.addf %39, %38 : vector<1x128xf32>
    %41 = tpu.concatenate %27, %40 in 0 : vector<1x128xf32>, vector<1x128xf32> -> vector<2x128xf32>
    %c0_27 = arith.constant 0 : index
    %c0_28 = arith.constant 0 : index
    %42 = vector.load %arg10[%c0_27, %c0_28] : memref<2x128xf32, #tpu.memory_space<vmem>>, vector<2x128xf32>
    tpu.vector_store %arg10[%c0_27, %c0_28], %41 {strides = array<i32>} : memref<2x128xf32, #tpu.memory_space<vmem>>, vector<2x128xf32>,
    return
  }
  func.func @transform_0(%arg0: i32) -> (i32, i32) {
    %c0_i32 = arith.constant 0 : i32
    %c0_i32_0 = arith.constant 0 : i32
    return %arg0, %c0_i32 : i32, i32
  }
  func.func @transform_1(%arg0: i32) -> (i32, i32) {
    %c0_i32 = arith.constant 0 : i32
    %c0_i32_0 = arith.constant 0 : i32
    %c0_i32_1 = arith.constant 0 : i32
    return %c0_i32, %c0_i32_0 : i32, i32
  }
  func.func @transform_2(%arg0: i32) -> (i32, i32) {
    %c0_i32 = arith.constant 0 : i32
    %c0_i32_0 = arith.constant 0 : i32
    %c0_i32_1 = arith.constant 0 : i32
    return %c0_i32, %c0_i32_0 : i32, i32
  }
  func.func @transform_3(%arg0: i32) -> (i32, i32) {
    %c0_i32 = arith.constant 0 : i32
    %c0_i32_0 = arith.constant 0 : i32
    %c0_i32_1 = arith.constant 0 : i32
    return %c0_i32, %c0_i32_0 : i32, i32
  }
  func.func @transform_4(%arg0: i32) -> (i32, i32) {
    %c0_i32 = arith.constant 0 : i32
    %c0_i32_0 = arith.constant 0 : i32
    %c0_i32_1 = arith.constant 0 : i32
    return %c0_i32, %c0_i32_0 : i32, i32
  }
  func.func @transform_5(%arg0: i32) -> (i32, i32) {
    %c0_i32 = arith.constant 0 : i32
    %c0_i32_0 = arith.constant 0 : i32
    %c0_i32_1 = arith.constant 0 : i32
    return %c0_i32, %c0_i32_0 : i32, i32
  }
  func.func @transform_6(%arg0: i32) -> (i32, i32) {
    %c0_i32 = arith.constant 0 : i32
    %c0_i32_0 = arith.constant 0 : i32
    %c0_i32_1 = arith.constant 0 : i32
    return %c0_i32, %c0_i32_0 : i32, i32
  }
  func.func @transform_7(%arg0: i32) -> (i32, i32) {
    %c0_i32 = arith.constant 0 : i32
    %c0_i32_0 = arith.constant 0 : i32
    %c0_i32_1 = arith.constant 0 : i32
    return %c0_i32, %c0_i32_0 : i32, i32
  }
  func.func @transform_8(%arg0: i32) -> (i32, i32) {
    %c0_i32 = arith.constant 0 : i32
    %c0_i32_0 = arith.constant 0 : i32
    %c0_i32_1 = arith.constant 0 : i32
    return %c0_i32, %c0_i32_0 : i32, i32
  }
  func.func @transform_9(%arg0: i32) -> (i32, i32) {
    %c0_i32 = arith.constant 0 : i32
    %c0_i32_0 = arith.constant 0 : i32
    return %c0_i32, %arg0 : i32, i32
  }
}

</mosaic_0001>

<llo_original>
// kernel: tpu_custom_call.1
$region0: #{tpu_custom_call.1}
  #allocation0 [shape = 'u32[]', space=smem, size = 0x4, offset = 0x4, fixed_abs, tag = 'smem constant byte address 0x4 - core index']
  #allocation1 [shape = 'u32[144,128]{1,0:T(1,128)}', space=vmem, size = 0x12000, scoped, tag = 'internal scratch']
  %s0 = inlined_call_operand.hbm [shape: f32[16,35], index: 0, kind: input, shape index: {}]
  %s1 = inlined_call_operand.vmem [shape: f32[32,35], index: 1, kind: input, shape index: {}]
  %s2 = inlined_call_operand.vmem [shape: f32[32,1], index: 2, kind: input, shape index: {}]
  %s3 = inlined_call_operand.vmem [shape: f32[32,32], index: 3, kind: input, shape index: {}]
  %s4 = inlined_call_operand.vmem [shape: f32[32,1], index: 4, kind: input, shape index: {}]
  %s5 = inlined_call_operand.vmem [shape: f32[32,32], index: 5, kind: input, shape index: {}]
  %s6 = inlined_call_operand.vmem [shape: f32[32,1], index: 6, kind: input, shape index: {}]
  %s7 = inlined_call_operand.vmem [shape: f32[2,32], index: 7, kind: input, shape index: {}]
  %s8 = inlined_call_operand.vmem [shape: f32[2,1], index: 8, kind: input, shape index: {}]
  %s9 = inlined_call_operand.hbm [shape: f32[2,16], index: 9, kind: output, shape index: {}]
  %s10 = sld [smem:[#allocation0]]
  $region50: #{tpu_custom_call.1} parent=0
    _
  %s12 = ssub.s32 1, %s10
  %s13 = scalar_select 0, %s12, %s10
  $region1: #{tpu_custom_call.1} parent=0
    #allocation2 [shape = 'u8[65536]{0}', space=vmem, size = 0x10000, scoped, tag = 'input window, operand 0, single buffered']
    #allocation3 [shape = 's32[1]{0}', space=sflag, size = 0x4, scoped, tag = 'scoped memory for tpu_custom_call.1']
    #allocation4 [shape = 's32[1]{0}', space=sflag, size = 0x4, scoped, tag = 'scoped memory for tpu_custom_call.1']
    #allocation5 [shape = 'u8[1024]{0}', space=vmem, size = 0x400, scoped, tag = 'output window, operand 0, single buffered']
    %14 = vsyncpa [#allocation3], 0
    %15 = vsyncpa [#allocation4], 0
    // Predicated region
    $region2: #{tpu_custom_call.1} parent=1 // pred_check
      _
    $region3: #{tpu_custom_call.1} parent=1 // pred_check_branch
      %17 = sbr.rel (0) target = $region5
    $region4: #{tpu_custom_call.1} parent=1 // pred_region
      %s19 = ssub.s32 2048, 256
      %20 = vsyncadd [#allocation3], %s19
      %s21 = sshll.u32 [#allocation2], 4
      %s22 = int_to_ptr.vmem [resolvable:$true] %s21
      %27 = dma.hbm_to_vmem [thread:$0]  %s0, 256, %s22, [#allocation3], 128, 128, 8
    $region5: #{tpu_custom_call.1} parent=1 // pred_fallthru
      _
    // Predicated region
    $region6: #{tpu_custom_call.1} parent=1 // pred_check
      _
    $region7: #{tpu_custom_call.1} parent=1 // pred_check_branch
      %29 = sbr.rel (0) target = $region9
    $region8: #{tpu_custom_call.1} parent=1 // pred_region
      _
    $region9: #{tpu_custom_call.1} parent=1 // pred_fallthru
      _
    // Predicated region
    $region10: #{tpu_custom_call.1} parent=1 // pred_check
      _
    $region11: #{tpu_custom_call.1} parent=1 // pred_check_branch
      %31 = sbr.rel (0) target = $region13
    $region12: #{tpu_custom_call.1} parent=1 // pred_region
      _
    $region13: #{tpu_custom_call.1} parent=1 // pred_fallthru
      _
    // Predicated region
    $region14: #{tpu_custom_call.1} parent=1 // pred_check
      _
    $region15: #{tpu_custom_call.1} parent=1 // pred_check_branch
      %33 = sbr.rel (0) target = $region17
    $region16: #{tpu_custom_call.1} parent=1 // pred_region
      _
    $region17: #{tpu_custom_call.1} parent=1 // pred_fallthru
      _
    // Predicated region
    $region18: #{tpu_custom_call.1} parent=1 // pred_check
      _
    $region19: #{tpu_custom_call.1} parent=1 // pred_check_branch
      %35 = sbr.rel (0) target = $region21
    $region20: #{tpu_custom_call.1} parent=1 // pred_region
      _
    $region21: #{tpu_custom_call.1} parent=1 // pred_fallthru
      _
    // Predicated region
    $region22: #{tpu_custom_call.1} parent=1 // pred_check
      _
    $region23: #{tpu_custom_call.1} parent=1 // pred_check_branch
      %37 = sbr.rel (0) target = $region25
    $region24: #{tpu_custom_call.1} parent=1 // pred_region
      _
    $region25: #{tpu_custom_call.1} parent=1 // pred_fallthru
      _
    // Predicated region
    $region26: #{tpu_custom_call.1} parent=1 // pred_check
      _
    $region27: #{tpu_custom_call.1} parent=1 // pred_check_branch
      %39 = sbr.rel (0) target = $region29
    $region28: #{tpu_custom_call.1} parent=1 // pred_region
      _
    $region29: #{tpu_custom_call.1} parent=1 // pred_fallthru
      _
    // Predicated region
    $region30: #{tpu_custom_call.1} parent=1 // pred_check
      _
    $region31: #{tpu_custom_call.1} parent=1 // pred_check_branch
      %41 = sbr.rel (0) target = $region33
    $region32: #{tpu_custom_call.1} parent=1 // pred_region
      _
    $region33: #{tpu_custom_call.1} parent=1 // pred_fallthru
      _
    // Predicated region
    $region34: #{tpu_custom_call.1} parent=1 // pred_check
      _
    $region35: #{tpu_custom_call.1} parent=1 // pred_check_branch
      %43 = sbr.rel (0) target = $region37
    $region36: #{tpu_custom_call.1} parent=1 // pred_region
      _
    $region37: #{tpu_custom_call.1} parent=1 // pred_fallthru
      _
    // Predicated region
    $region38: #{tpu_custom_call.1} parent=1 // pred_check
      _
    $region39: #{tpu_custom_call.1} parent=1 // pred_check_branch
      %45 = sbr.rel (0) target = $region41
    $region40: #{tpu_custom_call.1} parent=1 // pred_region
      %46 = dma.done [#allocation3], 2048
    $region41: #{tpu_custom_call.1} parent=1 // pred_fallthru
      _
    %v47 = vld [vmem:[%s1] sm:$0xff]
    %v48 = vld [vmem:[%s1 + $0x8] sm:$0xff]
    %v49 = vld [vmem:[%s1 + $0x10] sm:$0xff]
    %v50 = vld [vmem:[%s1 + $0x18] sm:$0xff]
    %v51 = vld [vmem:[#allocation2] sm:$0xff]
    %v52 = vld [vmem:[#allocation2 + $0x8] sm:$0xff]
    %v53 = vld [vmem:[#allocation2 + $0x10] sm:$0xff]
    %v54 = vld [vmem:[#allocation2 + $0x18] sm:$0xff]
    %v55 = vld [vmem:[#allocation2 + $0x20] sm:$0xff]
    %v56 = vld [vmem:[#allocation2 + $0x28] sm:$0xff]
    %v57 = vld [vmem:[#allocation2 + $0x30] sm:$0xff]
    %v58 = vld [vmem:[#allocation2 + $0x38] sm:$0xff]
    %v59 = vld [vmem:[#allocation2 + $0x40] sm:$0xff]
    %v60 = vld [vmem:[#allocation2 + $0x48] sm:$0xff]
    %v61 = vld [vmem:[#allocation2 + $0x50] sm:$0xff]
    %v62 = vld [vmem:[#allocation2 + $0x58] sm:$0xff]
    %v63 = vld [vmem:[#allocation2 + $0x60] sm:$0xff]
    %v64 = vld [vmem:[#allocation2 + $0x68] sm:$0xff]
    %v65 = vld [vmem:[#allocation2 + $0x70] sm:$0xff]
    %v66 = vld [vmem:[#allocation2 + $0x78] sm:$0xff]
    %v67 = vld [vmem:[%s2] sm:$0xff]
    %v68 = vld [vmem:[%s2 + $0x8] sm:$0xff]
    %v69 = vld [vmem:[%s2 + $0x10] sm:$0xff]
    %v70 = vld [vmem:[%s2 + $0x18] sm:$0xff]
    %72 = vset.pattern.permute.xlu0 0
    %73 = vperm.xlu0 %72, %v67
    %v74 = vpop.permute.xlu0 %73
    %77 = vset.pattern.permute.xlu0 0
    %78 = vperm.xlu0 %77, %v68
    %v79 = vpop.permute.xlu0 %78
    %82 = vset.pattern.permute.xlu0 0
    %83 = vperm.xlu0 %82, %v69
    %v84 = vpop.permute.xlu0 %83
    %87 = vset.pattern.permute.xlu0 0
    %88 = vperm.xlu0 %87, %v70
    %v89 = vpop.permute.xlu0 %88
    %vm91 = vcmask 285696
    %v93 = vsel %vm91, %v47, 0
    %v96 = vsel %vm91, %v48, 0
    %v99 = vsel %vm91, %v49, 0
    %v102 = vsel %vm91, %v50, 0
    %v105 = vsel %vm91, %v51, 0
    %v108 = vsel %vm91, %v52, 0
    %v111 = vsel %vm91, %v53, 0
    %v114 = vsel %vm91, %v54, 0
    %v117 = vsel %vm91, %v55, 0
    %v120 = vsel %vm91, %v56, 0
    %v123 = vsel %vm91, %v57, 0
    %v126 = vsel %vm91, %v58, 0
    %v129 = vsel %vm91, %v59, 0
    %v132 = vsel %vm91, %v60, 0
    %v135 = vsel %vm91, %v61, 0
    %v138 = vsel %vm91, %v62, 0
    %v141 = vsel %vm91, %v63, 0
    %v144 = vsel %vm91, %v64, 0
    %v147 = vsel %vm91, %v65, 0
    %v150 = vsel %vm91, %v66, 0
    %152 = vmatprep.subr.mxu0 0.0
    %153 = vmatpush1.xpose.msra.mxu0 %v105
    %154 = vmatprep.subr.mxu0 0.0
    %155 = vmatpush1.xpose.msra.mxu0 %v108
    %156 = vmatprep.subr.mxu0 0.0
    %157 = vmatpush1.xpose.msra.mxu0 %v111
    %158 = vmatprep.subr.mxu0 0.0
    %159 = vmatpush1.xpose.msra.mxu0 %v114
    %160 = vmatprep.subr.mxu0 0.0
    %161 = vmatpush1.xpose.msra.mxu0 %v117
    %162 = vmatprep.subr.mxu0 0.0
    %163 = vmatpush1.xpose.msra.mxu0 %v120
    %164 = vmatprep.subr.mxu0 0.0
    %165 = vmatpush1.xpose.msra.mxu0 %v123
    %166 = vmatprep.subr.mxu0 0.0
    %167 = vmatpush1.xpose.msra.mxu0 %v126
    %168 = vmatprep.subr.mxu0 0.0
    %169 = vmatpush1.xpose.msra.mxu0 %v129
    %170 = vmatprep.subr.mxu0 0.0
    %171 = vmatpush1.xpose.msra.mxu0 %v132
    %172 = vmatprep.subr.mxu0 0.0
    %173 = vmatpush1.xpose.msra.mxu0 %v135
    %174 = vmatprep.subr.mxu0 0.0
    %175 = vmatpush1.xpose.msra.mxu0 %v138
    %176 = vmatprep.subr.mxu0 0.0
    %177 = vmatpush1.xpose.msra.mxu0 %v141
    %178 = vmatprep.subr.mxu0 0.0
    %179 = vmatpush1.xpose.msra.mxu0 %v144
    %180 = vmatprep.subr.mxu0 0.0
    %181 = vmatpush1.xpose.msra.mxu0 %v147
    %182 = vmatprep.subr.mxu0 0.0
    %183 = vmatpush1.xpose.msra.mxu0 %v150
    %184 = vmatprep.subr.mxu0 0.0
    %185 = vmatpush1.xpose.msra.mxu0 0.0
    %186 = vmatprep.subr.mxu0 0.0
    %187 = vmatpush1.xpose.msra.mxu0 0.0
    %188 = vmatprep.subr.mxu0 0.0
    %189 = vmatpush1.xpose.msra.mxu0 0.0
    %190 = vmatprep.subr.mxu0 0.0
    %191 = vmatpush1.xpose.msra.mxu0 0.0
    %192 = vmatprep.subr.mxu0 0.0
    %193 = vmatpush1.xpose.msra.mxu0 0.0
    %194 = vmatprep.subr.mxu0 0.0
    %195 = vmatpush1.xpose.msra.mxu0 0.0
    %196 = vmatprep.subr.mxu0 0.0
    %197 = vmatpush1.xpose.msra.mxu0 0.0
    %198 = vmatprep.subr.mxu0 0.0
    %199 = vmatpush1.xpose.msra.mxu0 0.0
    %200 = vmatprep.subr.mxu0 0.0
    %201 = vmatpush1.xpose.msra.mxu0 0.0
    %202 = vmatprep.subr.mxu0 0.0
    %203 = vmatpush1.xpose.msra.mxu0 0.0
    %204 = vmatprep.subr.mxu0 0.0
    %205 = vmatpush1.xpose.msra.mxu0 0.0
    %206 = vmatprep.subr.mxu0 0.0
    %207 = vmatpush1.xpose.msra.mxu0 0.0
    %208 = vmatprep.subr.mxu0 0.0
    %209 = vmatpush1.xpose.msra.mxu0 0.0
    %210 = vmatprep.subr.mxu0 0.0
    %211 = vmatpush1.xpose.msra.mxu0 0.0
    %212 = vmatprep.subr.mxu0 0.0
    %213 = vmatpush1.xpose.msra.mxu0 0.0
    %214 = vmatprep.subr.mxu0 0.0
    %215 = vmatpush1.xpose.msra.mxu0 0.0
    %216 = vmatprep.mubr.f32.mxu0 0.0
    %217 = vmatmul.mubr.f32.gmra.mrb[0].mxu0 %v93
    %v218 = vpop.f32.mrb[0].mxu0
    %v219 = vadd.f32 %v74, %v218
    %v220 = vpop.f32.mrb[0].mxu0
    %221 = vmatprep.mubr.f32.mxu0 0.0
    %222 = vmatmul.mubr.f32.gmra.mrb[0].mxu0 %v96
    %v223 = vpop.f32.mrb[0].mxu0
    %v224 = vadd.f32 %v79, %v223
    %v225 = vpop.f32.mrb[0].mxu0
    %226 = vmatprep.mubr.f32.mxu0 0.0
    %227 = vmatmul.mubr.f32.gmra.mrb[0].mxu0 %v99
    %v228 = vpop.f32.mrb[0].mxu0
    %v229 = vadd.f32 %v84, %v228
    %v230 = vpop.f32.mrb[0].mxu0
    %231 = vmatprep.mubr.f32.mxu0 0.0
    %232 = vmatmul.mubr.f32.gmra.mrb[0].mxu0 %v102
    %v233 = vpop.f32.mrb[0].mxu0
    %v234 = vadd.f32 %v89, %v233
    %v235 = vpop.f32.mrb[0].mxu0
    %236 = vdwg.mxu0
    %v237 = vmax.f32 %v219, 0.0
    %v238 = vmax.f32 %v224, 0.0
    %v239 = vmax.f32 %v229, 0.0
    %v240 = vmax.f32 %v234, 0.0
    %v241 = vld [vmem:[%s3] sm:$0xff]
    %v242 = vld [vmem:[%s3 + $0x8] sm:$0xff]
    %v243 = vld [vmem:[%s3 + $0x10] sm:$0xff]
    %v244 = vld [vmem:[%s3 + $0x18] sm:$0xff]
    %v245 = vld [vmem:[%s4] sm:$0xff]
    %v246 = vld [vmem:[%s4 + $0x8] sm:$0xff]
    %v247 = vld [vmem:[%s4 + $0x10] sm:$0xff]
    %v248 = vld [vmem:[%s4 + $0x18] sm:$0xff]
    %250 = vset.pattern.permute.xlu0 0
    %251 = vperm.xlu0 %250, %v245
    %v252 = vpop.permute.xlu0 %251
    %255 = vset.pattern.permute.xlu0 0
    %256 = vperm.xlu0 %255, %v246
    %v257 = vpop.permute.xlu0 %256
    %260 = vset.pattern.permute.xlu0 0
    %261 = vperm.xlu0 %260, %v247
    %v262 = vpop.permute.xlu0 %261
    %265 = vset.pattern.permute.xlu0 0
    %266 = vperm.xlu0 %265, %v248
    %v267 = vpop.permute.xlu0 %266
    %vm269 = vcmask 261120
    %v271 = vsel %vm269, %v241, 0
    %v274 = vsel %vm269, %v242, 0
    %v277 = vsel %vm269, %v243, 0
    %v280 = vsel %vm269, %v244, 0
    %282 = vmatprep.subr.mxu0 0.0
    %283 = vmatpush1.msra.mxu0 %v237
    %284 = vmatprep.subr.mxu0 0.0
    %285 = vmatpush1.msra.mxu0 %v238
    %286 = vmatprep.subr.mxu0 0.0
    %287 = vmatpush1.msra.mxu0 %v239
    %288 = vmatprep.subr.mxu0 0.0
    %289 = vmatpush1.msra.mxu0 %v240
    %290 = vmatprep.subr.mxu0 0.0
    %291 = vmatpush1.msra.mxu0 0.0
    %292 = vmatprep.subr.mxu0 0.0
    %293 = vmatpush1.msra.mxu0 0.0
    %294 = vmatprep.subr.mxu0 0.0
    %295 = vmatpush1.msra.mxu0 0.0
    %296 = vmatprep.subr.mxu0 0.0
    %297 = vmatpush1.msra.mxu0 0.0
    %298 = vmatprep.subr.mxu0 0.0
    %299 = vmatpush1.msra.mxu0 0.0
    %300 = vmatprep.subr.mxu0 0.0
    %301 = vmatpush1.msra.mxu0 0.0
    %302 = vmatprep.subr.mxu0 0.0
    %303 = vmatpush1.msra.mxu0 0.0
    %304 = vmatprep.subr.mxu0 0.0
    %305 = vmatpush1.msra.mxu0 0.0
    %306 = vmatprep.subr.mxu0 0.0
    %307 = vmatpush1.msra.mxu0 0.0
    %308 = vmatprep.subr.mxu0 0.0
    %309 = vmatpush1.msra.mxu0 0.0
    %310 = vmatprep.subr.mxu0 0.0
    %311 = vmatpush1.msra.mxu0 0.0
    %312 = vmatprep.subr.mxu0 0.0
    %313 = vmatpush1.msra.mxu0 0.0
    %314 = vmatprep.subr.mxu0 0.0
    %315 = vmatpush1.msra.mxu0 0.0
    %316 = vmatprep.subr.mxu0 0.0
    %317 = vmatpush1.msra.mxu0 0.0
    %318 = vmatprep.subr.mxu0 0.0
    %319 = vmatpush1.msra.mxu0 0.0
    %320 = vmatprep.subr.mxu0 0.0
    %321 = vmatpush1.msra.mxu0 0.0
    %322 = vmatprep.subr.mxu0 0.0
    %323 = vmatpush1.msra.mxu0 0.0
    %324 = vmatprep.subr.mxu0 0.0
    %325 = vmatpush1.msra.mxu0 0.0
    %326 = vmatprep.subr.mxu0 0.0
    %327 = vmatpush1.msra.mxu0 0.0
    %328 = vmatprep.subr.mxu0 0.0
    %329 = vmatpush1.msra.mxu0 0.0
    %330 = vmatprep.subr.mxu0 0.0
    %331 = vmatpush1.msra.mxu0 0.0
    %332 = vmatprep.subr.mxu0 0.0
    %333 = vmatpush1.msra.mxu0 0.0
    %334 = vmatprep.subr.mxu0 0.0
    %335 = vmatpush1.msra.mxu0 0.0
    %336 = vmatprep.subr.mxu0 0.0
    %337 = vmatpush1.msra.mxu0 0.0
    %338 = vmatprep.subr.mxu0 0.0
    %339 = vmatpush1.msra.mxu0 0.0
    %340 = vmatprep.subr.mxu0 0.0
    %341 = vmatpush1.msra.mxu0 0.0
    %342 = vmatprep.subr.mxu0 0.0
    %343 = vmatpush1.msra.mxu0 0.0
    %344 = vmatprep.subr.mxu0 0.0
    %345 = vmatpush1.msra.mxu0 0.0
    %346 = vmatprep.mubr.f32.mxu0 0.0
    %347 = vmatmul.mubr.f32.gmra.mrb[0].mxu0 %v271
    %v348 = vpop.f32.mrb[0].mxu0
    %v349 = vadd.f32 %v252, %v348
    %v350 = vpop.f32.mrb[0].mxu0
    %351 = vmatprep.mubr.f32.mxu0 0.0
    %352 = vmatmul.mubr.f32.gmra.mrb[0].mxu0 %v274
    %v353 = vpop.f32.mrb[0].mxu0
    %v354 = vadd.f32 %v257, %v353
    %v355 = vpop.f32.mrb[0].mxu0
    %356 = vmatprep.mubr.f32.mxu0 0.0
    %357 = vmatmul.mubr.f32.gmra.mrb[0].mxu0 %v277
    %v358 = vpop.f32.mrb[0].mxu0
    %v359 = vadd.f32 %v262, %v358
    %v360 = vpop.f32.mrb[0].mxu0
    %361 = vmatprep.mubr.f32.mxu0 0.0
    %362 = vmatmul.mubr.f32.gmra.mrb[0].mxu0 %v280
    %v363 = vpop.f32.mrb[0].mxu0
    %v364 = vadd.f32 %v267, %v363
    %v365 = vpop.f32.mrb[0].mxu0
    %366 = vdwg.mxu0
    %v367 = vmax.f32 %v349, 0.0
    %v368 = vmax.f32 %v354, 0.0
    %v369 = vmax.f32 %v359, 0.0
    %v370 = vmax.f32 %v364, 0.0
    %v371 = vld [vmem:[%s5] sm:$0xff]
    %v372 = vld [vmem:[%s5 + $0x8] sm:$0xff]
    %v373 = vld [vmem:[%s5 + $0x10] sm:$0xff]
    %v374 = vld [vmem:[%s5 + $0x18] sm:$0xff]
    %v375 = vld [vmem:[%s6] sm:$0xff]
    %v376 = vld [vmem:[%s6 + $0x8] sm:$0xff]
    %v377 = vld [vmem:[%s6 + $0x10] sm:$0xff]
    %v378 = vld [vmem:[%s6 + $0x18] sm:$0xff]
    %380 = vset.pattern.permute.xlu0 0
    %381 = vperm.xlu0 %380, %v375
    %v382 = vpop.permute.xlu0 %381
    %385 = vset.pattern.permute.xlu0 0
    %386 = vperm.xlu0 %385, %v376
    %v387 = vpop.permute.xlu0 %386
    %390 = vset.pattern.permute.xlu0 0
    %391 = vperm.xlu0 %390, %v377
    %v392 = vpop.permute.xlu0 %391
    %395 = vset.pattern.permute.xlu0 0
    %396 = vperm.xlu0 %395, %v378
    %v397 = vpop.permute.xlu0 %396
    %v400 = vsel %vm269, %v371, 0
    %v403 = vsel %vm269, %v372, 0
    %v406 = vsel %vm269, %v373, 0
    %v409 = vsel %vm269, %v374, 0
    %411 = vmatprep.subr.mxu0 0.0
    %412 = vmatpush1.msra.mxu0 %v367
    %413 = vmatprep.subr.mxu0 0.0
    %414 = vmatpush1.msra.mxu0 %v368
    %415 = vmatprep.subr.mxu0 0.0
    %416 = vmatpush1.msra.mxu0 %v369
    %417 = vmatprep.subr.mxu0 0.0
    %418 = vmatpush1.msra.mxu0 %v370
    %419 = vmatprep.subr.mxu0 0.0
    %420 = vmatpush1.msra.mxu0 0.0
    %421 = vmatprep.subr.mxu0 0.0
    %422 = vmatpush1.msra.mxu0 0.0
    %423 = vmatprep.subr.mxu0 0.0
    %424 = vmatpush1.msra.mxu0 0.0
    %425 = vmatprep.subr.mxu0 0.0
    %426 = vmatpush1.msra.mxu0 0.0
    %427 = vmatprep.subr.mxu0 0.0
    %428 = vmatpush1.msra.mxu0 0.0
    %429 = vmatprep.subr.mxu0 0.0
    %430 = vmatpush1.msra.mxu0 0.0
    %431 = vmatprep.subr.mxu0 0.0
    %432 = vmatpush1.msra.mxu0 0.0
    %433 = vmatprep.subr.mxu0 0.0
    %434 = vmatpush1.msra.mxu0 0.0
    %435 = vmatprep.subr.mxu0 0.0
    %436 = vmatpush1.msra.mxu0 0.0
    %437 = vmatprep.subr.mxu0 0.0
    %438 = vmatpush1.msra.mxu0 0.0
    %439 = vmatprep.subr.mxu0 0.0
    %440 = vmatpush1.msra.mxu0 0.0
    %441 = vmatprep.subr.mxu0 0.0
    %442 = vmatpush1.msra.mxu0 0.0
    %443 = vmatprep.subr.mxu0 0.0
    %444 = vmatpush1.msra.mxu0 0.0
    %445 = vmatprep.subr.mxu0 0.0
    %446 = vmatpush1.msra.mxu0 0.0
    %447 = vmatprep.subr.mxu0 0.0
    %448 = vmatpush1.msra.mxu0 0.0
    %449 = vmatprep.subr.mxu0 0.0
    %450 = vmatpush1.msra.mxu0 0.0
    %451 = vmatprep.subr.mxu0 0.0
    %452 = vmatpush1.msra.mxu0 0.0
    %453 = vmatprep.subr.mxu0 0.0
    %454 = vmatpush1.msra.mxu0 0.0
    %455 = vmatprep.subr.mxu0 0.0
    %456 = vmatpush1.msra.mxu0 0.0
    %457 = vmatprep.subr.mxu0 0.0
    %458 = vmatpush1.msra.mxu0 0.0
    %459 = vmatprep.subr.mxu0 0.0
    %460 = vmatpush1.msra.mxu0 0.0
    %461 = vmatprep.subr.mxu0 0.0
    %462 = vmatpush1.msra.mxu0 0.0
    %463 = vmatprep.subr.mxu0 0.0
    %464 = vmatpush1.msra.mxu0 0.0
    %465 = vmatprep.subr.mxu0 0.0
    %466 = vmatpush1.msra.mxu0 0.0
    %467 = vmatprep.subr.mxu0 0.0
    %468 = vmatpush1.msra.mxu0 0.0
    %469 = vmatprep.subr.mxu0 0.0
    %470 = vmatpush1.msra.mxu0 0.0
    %471 = vmatprep.subr.mxu0 0.0
    %472 = vmatpush1.msra.mxu0 0.0
    %473 = vmatprep.subr.mxu0 0.0
    %474 = vmatpush1.msra.mxu0 0.0
    %475 = vmatprep.mubr.f32.mxu0 0.0
    %476 = vmatmul.mubr.f32.gmra.mrb[0].mxu0 %v400
    %v477 = vpop.f32.mrb[0].mxu0
    %v478 = vadd.f32 %v382, %v477
    %v479 = vpop.f32.mrb[0].mxu0
    %480 = vmatprep.mubr.f32.mxu0 0.0
    %481 = vmatmul.mubr.f32.gmra.mrb[0].mxu0 %v403
    %v482 = vpop.f32.mrb[0].mxu0
    %v483 = vadd.f32 %v387, %v482
    %v484 = vpop.f32.mrb[0].mxu0
    %485 = vmatprep.mubr.f32.mxu0 0.0
    %486 = vmatmul.mubr.f32.gmra.mrb[0].mxu0 %v406
    %v487 = vpop.f32.mrb[0].mxu0
    %v488 = vadd.f32 %v392, %v487
    %v489 = vpop.f32.mrb[0].mxu0
    %490 = vmatprep.mubr.f32.mxu0 0.0
    %491 = vmatmul.mubr.f32.gmra.mrb[0].mxu0 %v409
    %v492 = vpop.f32.mrb[0].mxu0
    %v493 = vadd.f32 %v397, %v492
    %v494 = vpop.f32.mrb[0].mxu0
    %495 = vdwg.mxu0
    %v496 = vmax.f32 %v478, 0.0
    %v497 = vmax.f32 %v483, 0.0
    %v498 = vmax.f32 %v488, 0.0
    %v499 = vmax.f32 %v493, 0.0
    %v500 = vld [vmem:[%s7] sm:$0x3]
    %v501 = vld [vmem:[%s8] sm:$0x3]
    %503 = vset.pattern.permute.xlu0 0
    %504 = vperm.xlu0 %503, %v501
    %v505 = vpop.permute.xlu0 %504
    %v508 = vsel %vm269, %v500, 0
    %510 = vmatprep.subr.mxu0 0.0
    %511 = vmatpush1.msra.mxu0 %v496
    %512 = vmatprep.subr.mxu0 0.0
    %513 = vmatpush1.msra.mxu0 %v497
    %514 = vmatprep.subr.mxu0 0.0
    %515 = vmatpush1.msra.mxu0 %v498
    %516 = vmatprep.subr.mxu0 0.0
    %517 = vmatpush1.msra.mxu0 %v499
    %518 = vmatprep.subr.mxu0 0.0
    %519 = vmatpush1.msra.mxu0 0.0
    %520 = vmatprep.subr.mxu0 0.0
    %521 = vmatpush1.msra.mxu0 0.0
    %522 = vmatprep.subr.mxu0 0.0
    %523 = vmatpush1.msra.mxu0 0.0
    %524 = vmatprep.subr.mxu0 0.0
    %525 = vmatpush1.msra.mxu0 0.0
    %526 = vmatprep.subr.mxu0 0.0
    %527 = vmatpush1.msra.mxu0 0.0
    %528 = vmatprep.subr.mxu0 0.0
    %529 = vmatpush1.msra.mxu0 0.0
    %530 = vmatprep.subr.mxu0 0.0
    %531 = vmatpush1.msra.mxu0 0.0
    %532 = vmatprep.subr.mxu0 0.0
    %533 = vmatpush1.msra.mxu0 0.0
    %534 = vmatprep.subr.mxu0 0.0
    %535 = vmatpush1.msra.mxu0 0.0
    %536 = vmatprep.subr.mxu0 0.0
    %537 = vmatpush1.msra.mxu0 0.0
    %538 = vmatprep.subr.mxu0 0.0
    %539 = vmatpush1.msra.mxu0 0.0
    %540 = vmatprep.subr.mxu0 0.0
    %541 = vmatpush1.msra.mxu0 0.0
    %542 = vmatprep.subr.mxu0 0.0
    %543 = vmatpush1.msra.mxu0 0.0
    %544 = vmatprep.subr.mxu0 0.0
    %545 = vmatpush1.msra.mxu0 0.0
    %546 = vmatprep.subr.mxu0 0.0
    %547 = vmatpush1.msra.mxu0 0.0
    %548 = vmatprep.subr.mxu0 0.0
    %549 = vmatpush1.msra.mxu0 0.0
    %550 = vmatprep.subr.mxu0 0.0
    %551 = vmatpush1.msra.mxu0 0.0
    %552 = vmatprep.subr.mxu0 0.0
    %553 = vmatpush1.msra.mxu0 0.0
    %554 = vmatprep.subr.mxu0 0.0
    %555 = vmatpush1.msra.mxu0 0.0
    %556 = vmatprep.subr.mxu0 0.0
    %557 = vmatpush1.msra.mxu0 0.0
    %558 = vmatprep.subr.mxu0 0.0
    %559 = vmatpush1.msra.mxu0 0.0
    %560 = vmatprep.subr.mxu0 0.0
    %561 = vmatpush1.msra.mxu0 0.0
    %562 = vmatprep.subr.mxu0 0.0
    %563 = vmatpush1.msra.mxu0 0.0
    %564 = vmatprep.subr.mxu0 0.0
    %565 = vmatpush1.msra.mxu0 0.0
    %566 = vmatprep.subr.mxu0 0.0
    %567 = vmatpush1.msra.mxu0 0.0
    %568 = vmatprep.subr.mxu0 0.0
    %569 = vmatpush1.msra.mxu0 0.0
    %570 = vmatprep.subr.mxu0 0.0
    %571 = vmatpush1.msra.mxu0 0.0
    %572 = vmatprep.subr.mxu0 0.0
    %573 = vmatpush1.msra.mxu0 0.0
    %574 = vmatprep.mubr.f32.mxu0 0.0
    %575 = vmatmul.mubr.f32.gmra.mrb[0].mxu0 %v508
    %v576 = vpop.f32.mrb[0].mxu0
    %v577 = vadd.f32 %v505, %v576
    %v578 = vpop.f32.mrb[0].mxu0
    %579 = vdwg.mxu0
    %v580 = vmax.f32 %v577, 0.0
    %v581 = vand.u32 2147483647, %v577
    %v582 = vsub.f32 0.0, %v581
    %v583 = vmul.f32 %v582, 1.442695
    %v584 = vpow.pop %v583
    %v585 = vadd.f32 %v584, 1.0
    %v586 = vlog2.pop %v585
    %v587 = vmul.f32 %v586, 0.6931472
    %v588 = vmul.f32 -0.5, %v584
    %v589 = vadd.f32 %v588, 1.0
    %v590 = vmul.f32 %v589, %v584
    %v591 = vand.u32 2147483647, %v584
    %vm592 = vcmp.lt.f32.partialorder %v591, 0.0004427343
    %v593 = vsel %vm592, %v590, %v587
    %v594 = vadd.f32 %v580, %v593
    %v595 = vmul.f32 %v594, 0.9
    %v596 = vadd.f32 %v595, 0.1
    %vm597 = vcmask 1040384
    %v598 = vsel %vm597, %v577, %v596
    %599 = vst [vmem:[#allocation5] sm:$0x3] %v598
    // Predicated region
    $region42: #{tpu_custom_call.1} parent=1 // pred_check
      _
    $region43: #{tpu_custom_call.1} parent=1 // pred_check_branch
      %601 = sbr.rel (0) target = $region45
    $region44: #{tpu_custom_call.1} parent=1 // pred_region
      %s603 = ssub.s32 32, 32
      %604 = vsyncadd [#allocation4], %s603
      %s606 = sshll.u32 [#allocation5], 4
      %s607 = int_to_ptr.vmem [resolvable:$true] %s606
      %609 = dma.vmem_to_hbm [thread:$0]  %s607, 32, %s9, [#allocation4]
    $region45: #{tpu_custom_call.1} parent=1 // pred_fallthru
      _
    // Predicated region
    $region46: #{tpu_custom_call.1} parent=1 // pred_check
      _
    $region47: #{tpu_custom_call.1} parent=1 // pred_check_branch
      %611 = sbr.rel (0) target = $region49
    $region48: #{tpu_custom_call.1} parent=1 // pred_region
      %612 = dma.done [#allocation4], 32
    $region49: #{tpu_custom_call.1} parent=1 // pred_fallthru
      _
    %613 = vsyncpa [#allocation3], 1
    %614 = vsyncpa [#allocation4], 1

</llo_original>
